<compile_context>
chip_gen: v5e
topology: v5e:2x2
jax: 0.10.0
libtpu: 0.0.40
codegen_flags: <defaults>
</compile_context>

<pallas_src>
import math
import numpy as np
import jax
import jax.numpy as jnp
from jax.experimental import pallas as pl
from jax.experimental.pallas import tpu as pltpu


# ---------------------------------------------------------------------------
# Pallas kernels (lane-dense: tiles are (C, tm) / (hidden, tm))
# ---------------------------------------------------------------------------

def _eps_mlp(x, cond, w1t, w2t, b2):
    # epsilon_theta for one (C, tm) pixel tile.
    h = jnp.dot(w1t, x, preferred_element_type=jnp.float32)            # (hidden, tm)
    h = jnp.maximum(h + cond, 0.0)                                      # cond: (hidden, 1)
    return jnp.dot(w2t, h, preferred_element_type=jnp.float32) + b2     # (C, tm)


def _ddim_kernel(coef_ref, x_ref, cond_ref, w1t_ref, w2t_ref, b2_ref, out_ref):
    # coef_ref: SMEM f32[3] = [sqrt(abar_prev/abar_t), sqrt_diff, sigma_t]
    x = x_ref[...]                                                      # (C, tm)
    eps = _eps_mlp(x, cond_ref[...], w1t_ref[...], w2t_ref[...], b2_ref[...])
    out_ref[...] = coef_ref[0] * x + coef_ref[1] * eps


def _ddim_kernel_noise(coef_ref, x_ref, cond_ref, w1t_ref, w2t_ref, b2_ref,
                       noise_ref, out_ref):
    x = x_ref[...]                                                      # (C, tm)
    eps = _eps_mlp(x, cond_ref[...], w1t_ref[...], w2t_ref[...], b2_ref[...])
    out_ref[...] = (coef_ref[0] * x + coef_ref[1] * eps
                    + coef_ref[2] * noise_ref[...])


def _pick_tile(hw):
    # Largest pixel tile (multiple of 128) that divides H*W; capped so the
    # double-buffered streams stay tiny even under v7x's 64 MiB VMEM.
    for tm in (2048, 1024, 512, 256, 128):
        if hw % tm == 0:
            return tm
    return hw  # small / irregular spatial size: one block spans the full row


def ddim_step(coef, x_k, cond, w1t, w2t, b2, noise=None):
    """One DDIM update on x in kernel layout (B, C, H*W)."""
    B, C, HW = x_k.shape
    hidden = w1t.shape[0]
    tm = _pick_tile(HW)
    grid = (B, HW // tm)

    x_spec = pl.BlockSpec((None, C, tm), lambda b, j: (b, 0, j))        # streamed
    cond_spec = pl.BlockSpec((None, hidden, 1), lambda b, j: (b, 0, 0))  # per-batch
    resident = lambda b, j: (0, 0)                                       # weights

    in_specs = [
        pl.BlockSpec(memory_space=pltpu.MemorySpace.SMEM),   # coef scalars
        x_spec,                                              # x_t (streamed)
        cond_spec,                                           # cond column
        pl.BlockSpec((hidden, C), resident),                 # w1ᵀ (VMEM-resident)
        pl.BlockSpec((C, hidden), resident),                 # w2ᵀ (VMEM-resident)
        pl.BlockSpec((C, 1), resident),                      # b2  (VMEM-resident)
    ]
    args = [coef, x_k, cond, w1t, w2t, b2]
    kernel = _ddim_kernel
    if noise is not None:                                    # only when sigma_t != 0
        in_specs.append(x_spec)
        args.append(noise)
        kernel = _ddim_kernel_noise

    return pl.pallas_call(
        kernel,
        out_shape=jax.ShapeDtypeStruct((B, C, HW), jnp.float32),
        grid=grid,
        in_specs=in_specs,
        out_specs=x_spec,
        input_output_aliases={1: 0},                         # in-place DDIM update
        compiler_params=pltpu.CompilerParams(
            dimension_semantics=("parallel", "parallel")),
    )(*args)


# ---------------------------------------------------------------------------
# jitted per-step path (no per-timestep retrace; layout kept across the loop)
# ---------------------------------------------------------------------------

def _cond_vectors(t, labels, label_emb, b1):
    # sinusoidal time embedding + label embedding (+ folded b1) -> (B, hidden, 1)
    hidden = label_emb.shape[1]
    half = hidden // 2
    freqs = jnp.exp(-math.log(10000.0)
                    * jnp.arange(half, dtype=jnp.float32) / half)
    ang = t * freqs
    t_emb = jnp.concatenate([jnp.sin(ang), jnp.cos(ang)])               # (hidden,)
    cond = label_emb[labels] + t_emb[None, :] + b1[None, :]             # (B, hidden)
    return cond[:, :, None]                                             # (B, hidden, 1)


@jax.jit
def _sample_step(x_k, coef, t, labels, label_emb, b1, w1t, w2t, b2):
    cond = _cond_vectors(t, labels, label_emb, b1)
    return ddim_step(coef, x_k, cond, w1t, w2t, b2)


@jax.jit
def _sample_step_noise(x_k, coef, t, labels, label_emb, b1, w1t, w2t, b2, noise):
    cond = _cond_vectors(t, labels, label_emb, b1)
    return ddim_step(coef, x_k, cond, w1t, w2t, b2, noise)


# ---------------------------------------------------------------------------
# Synthetic epsilon-model parameters + DDIM sampler
# ---------------------------------------------------------------------------

def init_eps_model_params(key, channels, hidden, num_classes):
    k1, k2, k3 = jax.random.split(key, 3)
    return {
        'w1': jax.random.normal(k1, (channels, hidden), jnp.float32) / math.sqrt(channels),
        'b1': jnp.zeros((1, hidden), jnp.float32),
        'w2': jax.random.normal(k2, (hidden, channels), jnp.float32) / math.sqrt(hidden),
        'b2': jnp.zeros((1, channels), jnp.float32),
        'label_emb': jax.random.normal(k3, (num_classes, hidden), jnp.float32) * 0.1,
    }


class DDIM:
    """JAX/Pallas port of the PyTorch DDIM sampler (forward-pass semantics)."""

    def __init__(self, model_params, beta, T, hidden):
        self.T = T
        self.hidden = hidden
        beta_t = np.linspace(beta[0], beta[1], T, dtype=np.float32)
        alpha_t = 1.0 - beta_t
        self.alpha_t_bar = np.cumprod(alpha_t, axis=0)
        self.one_minus_alpha_t_bar = 1.0 - self.alpha_t_bar
        # kernel-layout (lane-dense) copies of the epsilon-model parameters
        p = model_params
        self.w1t = jnp.asarray(p['w1']).T                    # (hidden, C)
        self.w2t = jnp.asarray(p['w2']).T                    # (C, hidden)
        self.b1 = jnp.asarray(p['b1']).reshape(-1)           # (hidden,)
        self.b2 = jnp.asarray(p['b2']).reshape(-1, 1)        # (C, 1)
        self.label_emb = jnp.asarray(p['label_emb'])         # (num_classes, hidden)

    def _step_coefs(self, t, prev_t, eta):
        abar_t = self.alpha_t_bar[t]
        abar_prev = self.alpha_t_bar[prev_t]
        # same arithmetic as the PyTorch reference (np.sqrt, like torch.sqrt,
        # propagates nan for negative arguments instead of raising)
        sigma_t = eta * np.sqrt(self.one_minus_alpha_t_bar[prev_t]
                                * (1.0 - abar_t / abar_prev))
        sqrt_alpha_ratio = np.sqrt(abar_prev / abar_t)
        sqrt_diff = (np.sqrt(self.one_minus_alpha_t_bar[prev_t] - sigma_t ** 2)
                     - np.sqrt(abar_prev * (1.0 - abar_t) / abar_t))
        coef = jnp.array([sqrt_alpha_ratio, sqrt_diff, sigma_t], dtype=jnp.float32)
        return float(sigma_t), coef

    def __call__(self, x_t, labels, key, steps=1, method='linear', eta=0.0,
                 only_return_x_0=True, interval=1):
        if method == 'linear':
            a = max(1, self.T // steps)
            time_steps = np.arange(self.T - 1, -1, -a)
        elif method == 'quadratic':
            time_steps = np.round(
                np.linspace(0, np.sqrt(self.T * 0.8), steps) ** 2).astype(int)
        else:
            raise NotImplementedError(
                f"Sampling method '{method}' is not implemented.")
        # NOTE: identical prev_t construction to the PyTorch reference (kept for
        # semantic fidelity; for i >= 1 prev_t > t, exactly like the reference).
        time_steps_prev = np.concatenate([[0], time_steps[:-1]])

        B, C, H, W = x_t.shape
        # lane-dense kernel layout for the whole sampling loop (pure reshape)
        x_k = jnp.asarray(x_t, jnp.float32).reshape(B, C, H * W)

        results = [jnp.asarray(x_t)]
        for i, t in enumerate(time_steps):
            prev_t = int(time_steps_prev[i])
            sigma_t, coef = self._step_coefs(int(t), prev_t, eta)
            t_val = jnp.float32(float(t))
            if sigma_t == 0.0:
                # eta == 0: noise coefficient is exactly zero -> skip the
                # noise HBM stream entirely (same result as the reference).
                x_k = _sample_step(x_k, coef, t_val, labels, self.label_emb,
                                   self.b1, self.w1t, self.w2t, self.b2)
            else:
                key, sub = jax.random.split(key)
                noise = jax.random.normal(sub, x_k.shape, dtype=x_k.dtype)
                x_k = _sample_step_noise(x_k, coef, t_val, labels,
                                         self.label_emb, self.b1, self.w1t,
                                         self.w2t, self.b2, noise)
            if not only_return_x_0 and (i % interval == 0
                                        or i == len(time_steps) - 1):
                results.append(jnp.clip(x_k, -1.0, 1.0).reshape(B, C, H, W))
        x_out = x_k.reshape(B, C, H, W)
        return x_out if only_return_x_0 else jnp.stack(results, axis=1)


if __name__ == "__main__":
    B, C, H, W = 2, 4, 16, 16
    hidden, num_classes, T = 32, 10, 8

    key = jax.random.PRNGKey(0)
    kx, kl, kp, kn = jax.random.split(key, 4)

    x = jax.random.normal(kx, (B, C, H, W), jnp.float32)          # NCHW, like PyTorch
    labels = jax.random.randint(kl, (B,), 0, num_classes)
    params = init_eps_model_params(kp, C, hidden, num_classes)

    ddim = DDIM(params, beta=(1e-4, 0.02), T=T, hidden=hidden)
    out = ddim(x, labels, kn, steps=1, eta=0.0, only_return_x_0=True)
    out = jax.block_until_ready(out)

    assert out.shape == (B, C, H, W) and out.dtype == jnp.float32
    assert bool(jnp.all(jnp.isfinite(out)))
    print("KERNEL_OK")
</pallas_src>

<mosaic_0001>
module attributes {stable_mosaic.version = 11 : i64} {
  func.func @_ddim_kernel(%arg0: i32, %arg1: i32, %arg2: memref<3xf32, #tpu.memory_space<smem>>, %arg3: memref<1x4x256xf32, #tpu.memory_space<vmem>>, %arg4: memref<1x32x1xf32, #tpu.memory_space<vmem>>, %arg5: memref<32x4xf32, #tpu.memory_space<vmem>>, %arg6: memref<4x32xf32, #tpu.memory_space<vmem>>, %arg7: memref<4x1xf32, #tpu.memory_space<vmem>>, %arg8: memref<1x4x256xf32, #tpu.memory_space<vmem>>) attributes {dimension_semantics = [#tpu.dimension_semantics<parallel>, #tpu.dimension_semantics<parallel>], iteration_bounds = array<i64: 2, 1>, scalar_prefetch = 0 : i64, scratch_operands = 0 : i64, tpu.core_type = #tpu.core_type<tc>, window_params = [{transform_indices = @transform_0, window_bounds = array<i64: 3>}, {transform_indices = @transform_1, window_bounds = array<i64: 1, 4, 256>}, {transform_indices = @transform_2, window_bounds = array<i64: 1, 32, 1>}, {pipeline_mode = #tpu.pipeline_mode<synchronous>, transform_indices = @transform_3, window_bounds = array<i64: 32, 4>}, {pipeline_mode = #tpu.pipeline_mode<synchronous>, transform_indices = @transform_4, window_bounds = array<i64: 4, 32>}, {pipeline_mode = #tpu.pipeline_mode<synchronous>, transform_indices = @transform_5, window_bounds = array<i64: 4, 1>}, {transform_indices = @transform_6, window_bounds = array<i64: 1, 4, 256>}]} {
    %c0 = arith.constant 0 : index
    %c0_0 = arith.constant 0 : index
    %c0_1 = arith.constant 0 : index
    %0 = vector.load %arg3[%c0, %c0_0, %c0_1] : memref<1x4x256xf32, #tpu.memory_space<vmem>>, vector<1x4x256xf32>
    %1 = vector.shape_cast %0 : vector<1x4x256xf32> to vector<4x256xf32>
    %c0_2 = arith.constant 0 : index
    %c0_3 = arith.constant 0 : index
    %c0_4 = arith.constant 0 : index
    %2 = vector.load %arg4[%c0_2, %c0_3, %c0_4] : memref<1x32x1xf32, #tpu.memory_space<vmem>>, vector<1x32x1xf32>
    %3 = vector.shape_cast %2 : vector<1x32x1xf32> to vector<32x1xf32>
    %c0_5 = arith.constant 0 : index
    %c0_6 = arith.constant 0 : index
    %4 = vector.load %arg5[%c0_5, %c0_6] : memref<32x4xf32, #tpu.memory_space<vmem>>, vector<32x4xf32>
    %c0_7 = arith.constant 0 : index
    %c0_8 = arith.constant 0 : index
    %5 = vector.load %arg6[%c0_7, %c0_8] : memref<4x32xf32, #tpu.memory_space<vmem>>, vector<4x32xf32>
    %c0_9 = arith.constant 0 : index
    %c0_10 = arith.constant 0 : index
    %6 = vector.load %arg7[%c0_9, %c0_10] : memref<4x1xf32, #tpu.memory_space<vmem>>, vector<4x1xf32>
    %cst = arith.constant dense<0.000000e+00> : vector<32x256xf32>
    %7 = tpu.matmul %4, %1, %cst {dimension_numbers = #tpu.dot_dimension_numbers<[1], [0], [0], [1], [0, 0, 1, 1], [], []>} : vector<32x4xf32>, vector<4x256xf32>, vector<32x256xf32> -> vector<32x256xf32>
    %8 = vector.broadcast %3 : vector<32x1xf32> to vector<32x256xf32>
    %9 = arith.addf %7, %8 : vector<32x256xf32>
    %cst_11 = arith.constant 0.000000e+00 : f32
    %10 = vector.broadcast %cst_11 : f32 to vector<32x256xf32>
    %11 = arith.maximumf %9, %10 : vector<32x256xf32>
    %cst_12 = arith.constant dense<0.000000e+00> : vector<4x256xf32>
    %12 = tpu.matmul %5, %11, %cst_12 {dimension_numbers = #tpu.dot_dimension_numbers<[1], [0], [0], [1], [0, 0, 1, 1], [], []>} : vector<4x32xf32>, vector<32x256xf32>, vector<4x256xf32> -> vector<4x256xf32>
    %13 = vector.broadcast %6 : vector<4x1xf32> to vector<4x256xf32>
    %14 = arith.addf %12, %13 : vector<4x256xf32>
    %c0_13 = arith.constant 0 : index
    %15 = memref.load %arg2[%c0_13] : memref<3xf32, #tpu.memory_space<smem>>
    %16 = vector.broadcast %15 : f32 to vector<4x256xf32>
    %17 = arith.mulf %16, %1 : vector<4x256xf32>
    %c1 = arith.constant 1 : index
    %18 = memref.load %arg2[%c1] : memref<3xf32, #tpu.memory_space<smem>>
    %19 = vector.broadcast %18 : f32 to vector<4x256xf32>
    %20 = arith.mulf %19, %14 : vector<4x256xf32>
    %21 = arith.addf %17, %20 : vector<4x256xf32>
    %c0_14 = arith.constant 0 : index
    %c0_15 = arith.constant 0 : index
    %c0_16 = arith.constant 0 : index
    %22 = vector.load %arg8[%c0_14, %c0_15, %c0_16] : memref<1x4x256xf32, #tpu.memory_space<vmem>>, vector<1x4x256xf32>
    %23 = vector.shape_cast %22 : vector<1x4x256xf32> to vector<4x256xf32>
    %24 = vector.shape_cast %21 : vector<4x256xf32> to vector<1x4x256xf32>
    tpu.vector_store %arg8[%c0_14, %c0_15, %c0_16], %24 {strides = array<i32>} : memref<1x4x256xf32, #tpu.memory_space<vmem>>, vector<1x4x256xf32>,
    return
  }
  func.func @transform_0(%arg0: i32, %arg1: i32) -> i32 {
    %c0_i32 = arith.constant 0 : i32
    %c0_i32_0 = arith.constant 0 : i32
    return %c0_i32 : i32
  }
  func.func @transform_1(%arg0: i32, %arg1: i32) -> (i32, i32, i32) {
    %c0_i32 = arith.constant 0 : i32
    %c0_i32_0 = arith.constant 0 : i32
    return %arg0, %c0_i32, %arg1 : i32, i32, i32
  }
  func.func @transform_2(%arg0: i32, %arg1: i32) -> (i32, i32, i32) {
    %c0_i32 = arith.constant 0 : i32
    %c0_i32_0 = arith.constant 0 : i32
    %c0_i32_1 = arith.constant 0 : i32
    return %arg0, %c0_i32, %c0_i32_0 : i32, i32, i32
  }
  func.func @transform_3(%arg0: i32, %arg1: i32) -> (i32, i32) {
    %c0_i32 = arith.constant 0 : i32
    %c0_i32_0 = arith.constant 0 : i32
    %c0_i32_1 = arith.constant 0 : i32
    return %c0_i32, %c0_i32_0 : i32, i32
  }
  func.func @transform_4(%arg0: i32, %arg1: i32) -> (i32, i32) {
    %c0_i32 = arith.constant 0 : i32
    %c0_i32_0 = arith.constant 0 : i32
    %c0_i32_1 = arith.constant 0 : i32
    return %c0_i32, %c0_i32_0 : i32, i32
  }
  func.func @transform_5(%arg0: i32, %arg1: i32) -> (i32, i32) {
    %c0_i32 = arith.constant 0 : i32
    %c0_i32_0 = arith.constant 0 : i32
    %c0_i32_1 = arith.constant 0 : i32
    return %c0_i32, %c0_i32_0 : i32, i32
  }
  func.func @transform_6(%arg0: i32, %arg1: i32) -> (i32, i32, i32) {
    %c0_i32 = arith.constant 0 : i32
    %c0_i32_0 = arith.constant 0 : i32
    return %arg0, %c0_i32, %arg1 : i32, i32, i32
  }
}

</mosaic_0001>

<llo_original>
// kernel: _sample_step.1
$region0: #{_sample_step.1}
  #allocation0 [shape = 'u32[]', space=smem, size = 0x4, offset = 0x4, fixed_abs, tag = 'smem constant byte address 0x4 - core index']
  #allocation1 [shape = 'u32[72,128]{1,0:T(1,128)}', space=vmem, size = 0x9000, scoped, tag = 'internal scratch']
  %s0 = inlined_call_operand.vmem [shape: f32[3], index: 0, kind: input, shape index: {}]
  %s1 = inlined_call_operand.hbm [shape: f32[2,4,256], index: 1, kind: input, shape index: {}, may-alias: {1,6}]
  %s2 = inlined_call_operand.vmem [shape: f32[2,32,1], index: 2, kind: input, shape index: {}]
  %s3 = inlined_call_operand.vmem [shape: f32[32,4], index: 3, kind: input, shape index: {}]
  %s4 = inlined_call_operand.vmem [shape: f32[4,32], index: 4, kind: input, shape index: {}]
  %s5 = inlined_call_operand.vmem [shape: f32[4,1], index: 5, kind: input, shape index: {}]
  %s6 = inlined_call_operand.hbm [shape: f32[2,4,256], index: 6, kind: output, shape index: {}, may-alias: {1,6}]
  %s7 = sld [smem:[#allocation0]]
  $region65: #{_sample_step.1} parent=0
    _
  %s9 = ssub.s32 1, %s7
  %s10 = scalar_select 0, %s9, %s7
  $region1: #{_sample_step.1} parent=0
    #allocation2 [shape = 'u8[512]{0}', space=smem, size = 0x200, scoped, tag = 'input window, operand 0, single buffered']
    #allocation3 [shape = 's32[2]{0}', space=sflag, size = 0x8, scoped, tag = 'scoped memory for _sample_step.1']
    #allocation4 [shape = 's32[2]{0}', space=sflag, size = 0x8, scoped, tag = 'scoped memory for _sample_step.1']
    #allocation5 [shape = 's32[2]{0}', space=sflag, size = 0x8, scoped, tag = 'scoped memory for _sample_step.1']
    #allocation6 [shape = 'u8[8192]{0}', space=vmem, size = 0x2000, scoped, tag = 'input window, operand 1']
    #allocation7 [shape = 'u8[8192]{0}', space=vmem, size = 0x2000, scoped, tag = 'output window, operand 0']
    %11 = vsyncpa [#allocation5], 0
    %12 = vsyncpa [#allocation3], 0
    %s13 = scalar_lea.sflag [#allocation3], 1
    %14 = vsyncpa %s13, 0
    %15 = vsyncpa [#allocation4], 0
    %s16 = scalar_lea.sflag [#allocation4], 1
    %17 = vsyncpa %s16, 0
    loop: start=0, step=1, limit=4
    $region2: #{_sample_step.1} parent=1 // loop_pre_header
      _
    $region3: #{_sample_step.1} parent=1 // loop_header
      %s19 = sphi 0, %s23
      %p20 = scmp.ge.s32.totalorder %s19, 4
      %s26 = sphi 0, %s38
      %s27 = sphi 0, %s34
      %s28 = sphi 0, %s26
      %s29 = sphi 0, %s27
      %s30 = sphi 0, %s28
      %s31 = sphi 0, %s29
      %s39 = sphi 0, %s39
      %s41 = sphi 0, %s39
      %s42 = sphi 0, %s41
      %s56 = sphi 0, %s42
      %s64 = sphi 0, %s66
      %s67 = sphi 0, %s64
      %s68 = sphi 0, %s67
      %s84 = sphi 0, %s68
      %s90 = sphi 0, %s92
      %s93 = sphi 0, %s90
      %s94 = sphi 0, %s93
      %s110 = sphi 0, %s94
      %s114 = sphi 0, %s114
      %s116 = sphi 0, %s114
      %s117 = sphi 0, %s116
      %s131 = sphi 0, %s117
      %s135 = sphi 0, %s135
      %s137 = sphi 0, %s135
      %s138 = sphi 0, %s137
      %s152 = sphi 0, %s138
      %s156 = sphi 0, %s156
      %s158 = sphi 0, %s156
      %s159 = sphi 0, %s158
      %s173 = sphi 0, %s159
      %s181 = sphi 0, %s183
      %s184 = sphi 0, %s181
      %s185 = sphi 0, %s184
      %s201 = sphi 0, %s185
    $region4: #{_sample_step.1} parent=1 // loop_header_branch
      %22 = sbr.rel (%p20) target = $region8
    $region5: #{_sample_step.1} parent=1 // loop_body
      %s24 = ssub.s32 %s19, 1
      %s25 = ssub.s32 %s19, 2
      %s32 = sadd.s32 1, %s27
      %p33 = scmp.ge.s32.totalorder %s32, 1
      %s34 = scalar_select %p33, 0, %s32
      %s35 = sadd.s32 1, %s26
      %s36 = scalar_select %p33, %s35, %s26
      %p37 = scmp.ge.s32.totalorder %s36, 2
      %s38 = scalar_select %p37, 0, %s36
      %s40 = sadd.s32 %s39, 1
      %p43 = scmp.eq.s32.totalorder %s19, 1
      %p44 = scmp.ne.s32.totalorder %s39, %s41
      %p45 = scmp.eq.s32.totalorder %s19, 0
      %p46 = por %p44, %p45
      %p47 = scmp.ne.s32.totalorder %s39, %s41
      %p48 = scmp.eq.s32.totalorder %s24, 1
      %p49 = por %p47, %p48
      %p50 = scmp.ne.s32.totalorder %s41, %s42
      %p51 = scmp.eq.s32.totalorder %s24, 0
      %p52 = por %p50, %p51
      %p53 = scmp.ne.s32.totalorder %s41, %s42
      %p54 = scmp.eq.s32.totalorder %s25, 1
      %p55 = por %p53, %p54
      %p57 = scmp.ne.s32.totalorder %s42, %s56
      %p58 = scmp.eq.s32.totalorder %s25, 0
      %p59 = por %p57, %p58
      %s60 = ssub.s32 %s26, %s38
      %s61 = ssub.s32 %s27, %s34
      %s62 = sor.u32 %s60, %s61
      %p63 = scmp.eq.s32.totalorder %s62, 0
      %s65 = sadd.s32 %s64, 1
      %s66 = scalar_select %p63, %s64, %s65
      %p69 = pneg %p63
      %p70 = scmp.eq.s32.totalorder %s19, 1
      %p71 = por %p69, %p70
      %p72 = scmp.ne.s32.totalorder %s64, %s67
      %p73 = scmp.eq.s32.totalorder %s19, 0
      %p74 = por %p72, %p73
      %p75 = scmp.ne.s32.totalorder %s64, %s67
      %p76 = scmp.eq.s32.totalorder %s24, 1
      %p77 = por %p75, %p76
      %p78 = scmp.ne.s32.totalorder %s67, %s68
      %p79 = scmp.eq.s32.totalorder %s24, 0
      %p80 = por %p78, %p79
      %p81 = scmp.ne.s32.totalorder %s67, %s68
      %p82 = scmp.eq.s32.totalorder %s25, 1
      %p83 = por %p81, %p82
      %p85 = scmp.ne.s32.totalorder %s68, %s84
      %p86 = scmp.eq.s32.totalorder %s25, 0
      %p87 = por %p85, %p86
      %s88 = ssub.s32 %s26, %s38
      %p89 = scmp.eq.s32.totalorder %s88, 0
      %s91 = sadd.s32 %s90, 1
      %s92 = scalar_select %p89, %s90, %s91
      %p95 = pneg %p89
      %p96 = scmp.eq.s32.totalorder %s19, 1
      %p97 = por %p95, %p96
      %p98 = scmp.ne.s32.totalorder %s90, %s93
      %p99 = scmp.eq.s32.totalorder %s19, 0
      %p100 = por %p98, %p99
      %p101 = scmp.ne.s32.totalorder %s90, %s93
      %p102 = scmp.eq.s32.totalorder %s24, 1
      %p103 = por %p101, %p102
      %p104 = scmp.ne.s32.totalorder %s93, %s94
      %p105 = scmp.eq.s32.totalorder %s24, 0
      %p106 = por %p104, %p105
      %p107 = scmp.ne.s32.totalorder %s93, %s94
      %p108 = scmp.eq.s32.totalorder %s25, 1
      %p109 = por %p107, %p108
      %p111 = scmp.ne.s32.totalorder %s94, %s110
      %p112 = scmp.eq.s32.totalorder %s25, 0
      %p113 = por %p111, %p112
      %s115 = sadd.s32 %s114, 1
      %p118 = scmp.eq.s32.totalorder %s19, 1
      %p119 = scmp.ne.s32.totalorder %s114, %s116
      %p120 = scmp.eq.s32.totalorder %s19, 0
      %p121 = por %p119, %p120
      %p122 = scmp.ne.s32.totalorder %s114, %s116
      %p123 = scmp.eq.s32.totalorder %s24, 1
      %p124 = por %p122, %p123
      %p125 = scmp.ne.s32.totalorder %s116, %s117
      %p126 = scmp.eq.s32.totalorder %s24, 0
      %p127 = por %p125, %p126
      %p128 = scmp.ne.s32.totalorder %s116, %s117
      %p129 = scmp.eq.s32.totalorder %s25, 1
      %p130 = por %p128, %p129
      %p132 = scmp.ne.s32.totalorder %s117, %s131
      %p133 = scmp.eq.s32.totalorder %s25, 0
      %p134 = por %p132, %p133
      %s136 = sadd.s32 %s135, 1
      %p139 = scmp.eq.s32.totalorder %s19, 1
      %p140 = scmp.ne.s32.totalorder %s135, %s137
      %p141 = scmp.eq.s32.totalorder %s19, 0
      %p142 = por %p140, %p141
      %p143 = scmp.ne.s32.totalorder %s135, %s137
      %p144 = scmp.eq.s32.totalorder %s24, 1
      %p145 = por %p143, %p144
      %p146 = scmp.ne.s32.totalorder %s137, %s138
      %p147 = scmp.eq.s32.totalorder %s24, 0
      %p148 = por %p146, %p147
      %p149 = scmp.ne.s32.totalorder %s137, %s138
      %p150 = scmp.eq.s32.totalorder %s25, 1
      %p151 = por %p149, %p150
      %p153 = scmp.ne.s32.totalorder %s138, %s152
      %p154 = scmp.eq.s32.totalorder %s25, 0
      %p155 = por %p153, %p154
      %s157 = sadd.s32 %s156, 1
      %p160 = scmp.eq.s32.totalorder %s19, 1
      %p161 = scmp.ne.s32.totalorder %s156, %s158
      %p162 = scmp.eq.s32.totalorder %s19, 0
      %p163 = por %p161, %p162
      %p164 = scmp.ne.s32.totalorder %s156, %s158
      %p165 = scmp.eq.s32.totalorder %s24, 1
      %p166 = por %p164, %p165
      %p167 = scmp.ne.s32.totalorder %s158, %s159
      %p168 = scmp.eq.s32.totalorder %s24, 0
      %p169 = por %p167, %p168
      %p170 = scmp.ne.s32.totalorder %s158, %s159
      %p171 = scmp.eq.s32.totalorder %s25, 1
      %p172 = por %p170, %p171
      %p174 = scmp.ne.s32.totalorder %s159, %s173
      %p175 = scmp.eq.s32.totalorder %s25, 0
      %p176 = por %p174, %p175
      %s177 = ssub.s32 %s26, %s38
      %s178 = ssub.s32 %s27, %s34
      %s179 = sor.u32 %s177, %s178
      %p180 = scmp.eq.s32.totalorder %s179, 0
      %s182 = sadd.s32 %s181, 1
      %s183 = scalar_select %p180, %s181, %s182
      %p186 = pneg %p180
      %p187 = scmp.eq.s32.totalorder %s19, 1
      %p188 = por %p186, %p187
      %p189 = scmp.ne.s32.totalorder %s181, %s184
      %p190 = scmp.eq.s32.totalorder %s19, 0
      %p191 = por %p189, %p190
      %p192 = scmp.ne.s32.totalorder %s181, %s184
      %p193 = scmp.eq.s32.totalorder %s24, 1
      %p194 = por %p192, %p193
      %p195 = scmp.ne.s32.totalorder %s184, %s185
      %p196 = scmp.eq.s32.totalorder %s24, 0
      %p197 = por %p195, %p196
      %p198 = scmp.ne.s32.totalorder %s184, %s185
      %p199 = scmp.eq.s32.totalorder %s25, 1
      %p200 = por %p198, %p199
      %p202 = scmp.ne.s32.totalorder %s185, %s201
      %p203 = scmp.eq.s32.totalorder %s25, 0
      %p204 = por %p202, %p203
      %p205 = scmp.le.s32.totalorder 1, %s19
      %p206 = scmp.lt.s32.totalorder %s19, 3
      %p207 = pnand %p205, %p206
      %p208 = pneg %p207
      // Predicated region
      $region9: #{_sample_step.1} parent=5 // pred_check
        _
      $region10: #{_sample_step.1} parent=5 // pred_check_branch
        %210 = sbr.rel (%p207) target = $region12
      $region11: #{_sample_step.1} parent=5 // pred_region
        %s211 = ssub.s32 %s19, 1
        // Predicated region
        $region13: #{_sample_step.1} parent=11 // pred_check
          %p212 = pneg %p52
        $region14: #{_sample_step.1} parent=11 // pred_check_branch
          %214 = sbr.rel (%p212) target = $region16
        $region15: #{_sample_step.1} parent=11 // pred_region
          %216 = vsyncadd [#allocation5], 0
          %s218 = sshll.u32 %s0, 4
          %s219 = int_to_ptr.vmem [resolvable:$true] %s218
          %221 = dma.vmem_to_smem %s219, 16, [#allocation2], [#allocation5]
        $region16: #{_sample_step.1} parent=11 // pred_fallthru
          _
        // Predicated region
        $region17: #{_sample_step.1} parent=11 // pred_check
          %p222 = pneg %p127
        $region18: #{_sample_step.1} parent=11 // pred_check_branch
          %224 = sbr.rel (%p222) target = $region20
        $region19: #{_sample_step.1} parent=11 // pred_region
          _
        $region20: #{_sample_step.1} parent=11 // pred_fallthru
          _
        // Predicated region
        $region21: #{_sample_step.1} parent=11 // pred_check
          %p225 = pneg %p148
        $region22: #{_sample_step.1} parent=11 // pred_check_branch
          %227 = sbr.rel (%p225) target = $region24
        $region23: #{_sample_step.1} parent=11 // pred_region
          _
        $region24: #{_sample_step.1} parent=11 // pred_fallthru
          _
        // Predicated region
        $region25: #{_sample_step.1} parent=11 // pred_check
          %p228 = pneg %p169
        $region26: #{_sample_step.1} parent=11 // pred_check_branch
          %230 = sbr.rel (%p228) target = $region28
        $region27: #{_sample_step.1} parent=11 // pred_region
          _
        $region28: #{_sample_step.1} parent=11 // pred_fallthru
          _
      $region12: #{_sample_step.1} parent=5 // pred_fallthru
        _
      %p231 = scmp.lt.s32.totalorder %s19, 2
      // Predicated region
      $region29: #{_sample_step.1} parent=5 // pred_check
        %p232 = pneg %p231
      $region30: #{_sample_step.1} parent=5 // pred_check_branch
        %234 = sbr.rel (%p232) target = $region32
      $region31: #{_sample_step.1} parent=5 // pred_region
        // Predicated region
        $region33: #{_sample_step.1} parent=31 // pred_check
          %p235 = pneg %p74
        $region34: #{_sample_step.1} parent=31 // pred_check_branch
          %237 = sbr.rel (%p235) target = $region36
        $region35: #{_sample_step.1} parent=31 // pred_region
          %s238 = sand.u32 %s64, 1
          %s239 = scalar_lea.sflag [#allocation3], %s238
          %s240 = sand.u32 %s64, 1
          %s241 = smul.addr %s240, 8
          %s242 = scalar_lea.vmem [#allocation6], %s241
          %s243 = smul.u32 2, %s27
          %245 = vsyncadd %s239, 0
          %s246 = smul.addr %s26, 2
          %s247 = sadd.s32 %s243, %s246
          %s248 = smul.addr %s247, 4
          %s249 = scalar_lea.hbm %s1, %s248
          %s251 = sshll.u32 %s249, 4
          %s252 = int_to_ptr.hbm [resolvable:$true] %s251
          %s253 = sshll.u32 %s242, 4
          %s254 = int_to_ptr.vmem [resolvable:$true] %s253
          %256 = dma.hbm_to_vmem [thread:$0]  %s252, 128, %s254, %s239
        $region36: #{_sample_step.1} parent=31 // pred_fallthru
          _
        // Predicated region
        $region37: #{_sample_step.1} parent=31 // pred_check
          %p257 = pneg %p100
        $region38: #{_sample_step.1} parent=31 // pred_check_branch
          %259 = sbr.rel (%p257) target = $region40
        $region39: #{_sample_step.1} parent=31 // pred_region
          %p260 = scmp.lt.s32.totalorder %s26, 1
          %s261 = scalar_select %p260, %s26, 1
          %s262 = smul.addr %s261, 4
          %s263 = smul.addr %s262, 8
          %s264 = scalar_lea.vmem %s2, %s263
        $region40: #{_sample_step.1} parent=31 // pred_fallthru
          _
      $region32: #{_sample_step.1} parent=5 // pred_fallthru
        _
      %p265 = scmp.le.s32.totalorder 1, %s19
      %p266 = scmp.lt.s32.totalorder %s19, 3
      %p267 = pnand %p265, %p266
      %p268 = pneg %p267
      // Predicated region
      $region41: #{_sample_step.1} parent=5 // pred_check
        _
      $region42: #{_sample_step.1} parent=5 // pred_check_branch
        %270 = sbr.rel (%p267) target = $region44
      $region43: #{_sample_step.1} parent=5 // pred_region
        %s271 = ssub.s32 %s19, 1
        // Predicated region
        $region45: #{_sample_step.1} parent=43 // pred_check
          %p272 = pneg %p52
        $region46: #{_sample_step.1} parent=43 // pred_check_branch
          %274 = sbr.rel (%p272) target = $region48
        $region47: #{_sample_step.1} parent=43 // pred_region
          %276 = dma.done [#allocation5], 16
        $region48: #{_sample_step.1} parent=43 // pred_fallthru
          _
        %s277 = sand.u32 %s67, 1
        %s278 = scalar_lea.sflag [#allocation3], %s277
        %s279 = sand.u32 %s67, 1
        %s280 = smul.addr %s279, 8
        %s281 = scalar_lea.vmem [#allocation6], %s280
        // Predicated region
        $region49: #{_sample_step.1} parent=43 // pred_check
          %p282 = pneg %p80
        $region50: #{_sample_step.1} parent=43 // pred_check_branch
          %284 = sbr.rel (%p282) target = $region52
        $region51: #{_sample_step.1} parent=43 // pred_region
          %286 = dma.done %s278, 128
        $region52: #{_sample_step.1} parent=43 // pred_fallthru
          _
        %287 = sfence
        %p288 = pneg %p52
        %p289 = pneg %p49
        %s290 = sand.u32 %s67, 1
        %s291 = scalar_lea.sflag [#allocation3], %s290
        %s292 = sand.u32 %s67, 1
        %s293 = smul.addr %s292, 8
        %s294 = scalar_lea.vmem [#allocation6], %s293
        %p295 = pneg %p80
        %p296 = pneg %p77
        %p297 = scmp.lt.s32.totalorder %s28, 1
        %s298 = scalar_select %p297, %s28, 1
        %s299 = smul.addr %s298, 4
        %s300 = smul.addr %s299, 8
        %s301 = scalar_lea.vmem %s2, %s300
        %p302 = pneg %p106
        %p303 = pneg %p103
        %p304 = pneg %p127
        %p305 = pneg %p124
        %p306 = pneg %p148
        %p307 = pneg %p145
        %p308 = pneg %p169
        %p309 = pneg %p166
        %p310 = pneg %p197
        %p311 = pneg %p194
        %s312 = sand.u32 %s184, 1
        %s313 = scalar_lea.sflag [#allocation4], %s312
        %s314 = sand.u32 %s184, 1
        %s315 = smul.addr %s314, 8
        %s316 = scalar_lea.vmem [#allocation7], %s315
        %s317 = smul.u32 2, %s29
        %p318 = scmp.lt.s32.totalorder %s28, 1
        %s319 = scalar_select %p318, %s28, 1
        %s320 = smul.addr %s319, 4
        %s321 = smul.addr %s320, 8
        %s322 = scalar_lea.vmem %s2, %s321
        %s323 = smul.u32 2, %s29
        %v324 = vld [vmem:[%s281] sm:$0xff]
        %v325 = vld [vmem:[%s322] sm:$0xff]
        %v326 = vld [vmem:[%s322 + $0x8] sm:$0xff]
        %v327 = vld [vmem:[%s322 + $0x10] sm:$0xff]
        %v328 = vld [vmem:[%s322 + $0x18] sm:$0xff]
        %v329 = vld [vmem:[%s3] sm:$0xff]
        %v330 = vld [vmem:[%s3 + $0x8] sm:$0xff]
        %v331 = vld [vmem:[%s3 + $0x10] sm:$0xff]
        %v332 = vld [vmem:[%s3 + $0x18] sm:$0xff]
        %v333 = vld [vmem:[%s4] sm:$0xf]
        %v334 = vld [vmem:[%s5] sm:$0xf]
        %336 = vset.pattern.permute.xlu0 0
        %337 = vperm.xlu0 %336, %v325
        %v338 = vpop.permute.xlu0 %337
        %341 = vset.pattern.permute.xlu0 0
        %342 = vperm.xlu0 %341, %v326
        %v343 = vpop.permute.xlu0 %342
        %346 = vset.pattern.permute.xlu0 0
        %347 = vperm.xlu0 %346, %v327
        %v348 = vpop.permute.xlu0 %347
        %351 = vset.pattern.permute.xlu0 0
        %352 = vperm.xlu0 %351, %v328
        %v353 = vpop.permute.xlu0 %352
        %356 = vst [vmem:[#allocation1] ss:$2 sm:$0xff] %v324
        %v357 = vld.sshfl [vmem:[#allocation1] sm:$0xff pattern:$0x75316420]
        %v358 = vld.sshfl [vmem:[#allocation1 + $0x8] sm:$0xff pattern:$0x75316420]
        %vm359 = vcmask 31744
        %v361 = vsel %vm359, %v329, 0
        %v364 = vsel %vm359, %v330, 0
        %v367 = vsel %vm359, %v331, 0
        %v370 = vsel %vm359, %v332, 0
        %vm372 = vcmask 1043456
        %v373 = vsel %vm372, %v357, 0
        %v375 = vsel %vm372, %v358, 0
        %377 = vmatpush.msra.mxu0 0.0
        %378 = vmatpush.msra.mxu0 0.0
        %379 = vmatpush.msra.mxu0 0.0
        %380 = vmatpush.msra.mxu0 0.0
        %381 = vmatpush.msra.mxu0 0.0
        %382 = vmatpush.msra.mxu0 0.0
        %383 = vmatpush.msra.mxu0 0.0
        %384 = vmatpush.msra.mxu0 0.0
        %385 = vmatpush.msra.mxu0 0.0
        %386 = vmatpush.msra.mxu0 0.0
        %387 = vmatpush.msra.mxu0 0.0
        %388 = vmatpush.msra.mxu0 0.0
        %389 = vmatpush.msra.mxu0 0.0
        %390 = vmatpush.msra.mxu0 0.0
        %391 = vmatpush.msra.mxu0 0.0
        %392 = vmatpush.msra.mxu0 %v373
        %393 = vmatmul.f32.gmra.mxu0 %v361
        %v394 = vpop.f32.mrf.mxu0
        %v395 = vadd.f32 %v338, %v394
        %396 = vmatmul.f32.gmra.mxu0 %v364
        %v397 = vpop.f32.mrf.mxu0
        %v398 = vadd.f32 %v343, %v397
        %399 = vmatmul.f32.gmra.mxu0 %v367
        %v400 = vpop.f32.mrf.mxu0
        %v401 = vadd.f32 %v348, %v400
        %402 = vmatmul.f32.gmra.mxu0 %v370
        %v403 = vpop.f32.mrf.mxu0
        %v404 = vadd.f32 %v353, %v403
        %405 = vdwg.mxu0
        %406 = vmatpush.msra.mxu0 0.0
        %407 = vmatpush.msra.mxu0 0.0
        %408 = vmatpush.msra.mxu0 0.0
        %409 = vmatpush.msra.mxu0 0.0
        %410 = vmatpush.msra.mxu0 0.0
        %411 = vmatpush.msra.mxu0 0.0
        %412 = vmatpush.msra.mxu0 0.0
        %413 = vmatpush.msra.mxu0 0.0
        %414 = vmatpush.msra.mxu0 0.0
        %415 = vmatpush.msra.mxu0 0.0
        %416 = vmatpush.msra.mxu0 0.0
        %417 = vmatpush.msra.mxu0 0.0
        %418 = vmatpush.msra.mxu0 0.0
        %419 = vmatpush.msra.mxu0 0.0
        %420 = vmatpush.msra.mxu0 0.0
        %421 = vmatpush.msra.mxu0 %v375
        %422 = vmatmul.f32.gmra.mxu0 %v361
        %v423 = vpop.f32.mrf.mxu0
        %v424 = vadd.f32 %v338, %v423
        %425 = vmatmul.f32.gmra.mxu0 %v364
        %v426 = vpop.f32.mrf.mxu0
        %v427 = vadd.f32 %v343, %v426
        %428 = vmatmul.f32.gmra.mxu0 %v367
        %v429 = vpop.f32.mrf.mxu0
        %v430 = vadd.f32 %v348, %v429
        %431 = vmatmul.f32.gmra.mxu0 %v370
        %v432 = vpop.f32.mrf.mxu0
        %v433 = vadd.f32 %v353, %v432
        %434 = vdwg.mxu0
        %v435 = vmax.f32 %v395, 0.0
        %v436 = vmax.f32 %v424, 0.0
        %v437 = vmax.f32 %v398, 0.0
        %v438 = vmax.f32 %v427, 0.0
        %v439 = vmax.f32 %v401, 0.0
        %v440 = vmax.f32 %v430, 0.0
        %v441 = vmax.f32 %v404, 0.0
        %v442 = vmax.f32 %v433, 0.0
        %444 = vset.pattern.permute.xlu0 0
        %445 = vperm.xlu0 %444, %v334
        %v446 = vpop.permute.xlu0 %445
        %vm448 = vcmask 261120
        %v450 = vsel %vm448, %v333, 0
        %452 = vmatpush.msra.mxu0 0.0
        %453 = vmatpush.msra.mxu0 0.0
        %454 = vmatpush.msra.mxu0 0.0
        %455 = vmatpush.msra.mxu0 0.0
        %456 = vmatpush.msra.mxu0 0.0
        %457 = vmatpush.msra.mxu0 0.0
        %458 = vmatpush.msra.mxu0 0.0
        %459 = vmatpush.msra.mxu0 0.0
        %460 = vmatpush.msra.mxu0 0.0
        %461 = vmatpush.msra.mxu0 0.0
        %462 = vmatpush.msra.mxu0 0.0
        %463 = vmatpush.msra.mxu0 0.0
        %464 = vmatpush.msra.mxu0 %v441
        %465 = vmatpush.msra.mxu0 %v439
        %466 = vmatpush.msra.mxu0 %v437
        %467 = vmatpush.msra.mxu0 %v435
        %468 = vmatmul.f32.gmra.mxu0 %v450
        %v469 = vpop.f32.mrf.mxu0
        %v470 = vadd.f32 %v446, %v469
        %471 = vdwg.mxu0
        %472 = vmatpush.msra.mxu0 0.0
        %473 = vmatpush.msra.mxu0 0.0
        %474 = vmatpush.msra.mxu0 0.0
        %475 = vmatpush.msra.mxu0 0.0
        %476 = vmatpush.msra.mxu0 0.0
        %477 = vmatpush.msra.mxu0 0.0
        %478 = vmatpush.msra.mxu0 0.0
        %479 = vmatpush.msra.mxu0 0.0
        %480 = vmatpush.msra.mxu0 0.0
        %481 = vmatpush.msra.mxu0 0.0
        %482 = vmatpush.msra.mxu0 0.0
        %483 = vmatpush.msra.mxu0 0.0
        %484 = vmatpush.msra.mxu0 %v442
        %485 = vmatpush.msra.mxu0 %v440
        %486 = vmatpush.msra.mxu0 %v438
        %487 = vmatpush.msra.mxu0 %v436
        %488 = vmatmul.f32.gmra.mxu0 %v450
        %v489 = vpop.f32.mrf.mxu0
        %v490 = vadd.f32 %v446, %v489
        %491 = vdwg.mxu0
        %s492 = sld [smem:[#allocation2]]
        %v493 = vstv %s492
        %v494 = vmul.f32 %v493, %v324
        %s495 = sld [smem:[#allocation2 + $0x1]]
        %v496 = vstv %s495
        %v497 = vmul.f32 %v496, %v470
        %v498 = vmul.f32 %v496, %v490
        %v501 = vrot.slane %v498, 4
        %v502 = vsel %vm372, %v497, %v501
        %v504 = vadd.f32 %v494, %v502
        %505 = vst [vmem:[%s316] sm:$0xff] %v504
        %s506 = sand.u32 %s184, 1
        %s507 = scalar_lea.sflag [#allocation4], %s506
        %s508 = sand.u32 %s184, 1
        %s509 = smul.addr %s508, 8
        %s510 = scalar_lea.vmem [#allocation7], %s509
        // Predicated region
        $region53: #{_sample_step.1} parent=43 // pred_check
          %p511 = pneg %p194
        $region54: #{_sample_step.1} parent=43 // pred_check_branch
          %513 = sbr.rel (%p511) target = $region56
        $region55: #{_sample_step.1} parent=43 // pred_region
          %s514 = smul.u32 2, %s29
          %516 = vsyncadd %s507, 0
          %s517 = smul.addr %s28, 2
          %s518 = sadd.s32 %s514, %s517
          %s519 = smul.addr %s518, 4
          %s520 = scalar_lea.hbm %s6, %s519
          %s522 = sshll.u32 %s510, 4
          %s523 = int_to_ptr.vmem [resolvable:$true] %s522
          %s524 = sshll.u32 %s520, 4
          %s525 = int_to_ptr.hbm [resolvable:$true] %s524
          %527 = dma.vmem_to_hbm [thread:$0]  %s523, 128, %s525, %s507
        $region56: #{_sample_step.1} parent=43 // pred_fallthru
          _
      $region44: #{_sample_step.1} parent=5 // pred_fallthru
        _
      %p528 = scmp.le.s32.totalorder 2, %s19
      // Predicated region
      $region57: #{_sample_step.1} parent=5 // pred_check
        %p529 = pneg %p528
      $region58: #{_sample_step.1} parent=5 // pred_check_branch
        %531 = sbr.rel (%p529) target = $region60
      $region59: #{_sample_step.1} parent=5 // pred_region
        %s532 = ssub.s32 %s19, 2
        // Predicated region
        $region61: #{_sample_step.1} parent=59 // pred_check
          %p533 = pneg %p200
        $region62: #{_sample_step.1} parent=59 // pred_check_branch
          %535 = sbr.rel (%p533) target = $region64
        $region63: #{_sample_step.1} parent=59 // pred_region
          %s536 = sand.u32 %s185, 1
          %s537 = scalar_lea.sflag [#allocation4], %s536
          %s538 = sand.u32 %s185, 1
          %s539 = smul.addr %s538, 8
          %s540 = scalar_lea.vmem [#allocation7], %s539
          %542 = dma.done %s537, 128
        $region64: #{_sample_step.1} parent=59 // pred_fallthru
          _
      $region60: #{_sample_step.1} parent=5 // pred_fallthru
        _
    $region6: #{_sample_step.1} parent=1 // loop_footer
      %s23 = sadd.s32 1, %s19
    $region7: #{_sample_step.1} parent=1 // loop_footer_branch
      %18 = sbr.rel target = $region3
    $region8: #{_sample_step.1} parent=1 // loop_exit
      _
    %543 = vsyncpa [#allocation3], 1
    %s544 = scalar_lea.sflag [#allocation3], 1
    %545 = vsyncpa %s544, 1
    %546 = vsyncpa [#allocation4], 1
    %s547 = scalar_lea.sflag [#allocation4], 1
    %548 = vsyncpa %s547, 1
    %549 = vsyncpa [#allocation5], 1
    %s550 = scalar_lea.sflag [#allocation5], 1
    %551 = vsyncpa %s550, 1

</llo_original>
